<compile_context>
chip_gen: v7x
topology: tpu7x:2x2x1
jax: 0.10.0
libtpu: 0.0.40
codegen_flags: <defaults>
</compile_context>

<pallas_src>
import jax
import jax.numpy as jnp
from jax.experimental import pallas as pl
from jax.experimental.pallas import tpu as pltpu


def _round_up(n, m):
    return ((n + m - 1) // m) * m


def hockeynet_kernel(x_ref, w1_ref, b1_ref, w2_ref, b2_ref, w3_ref, b3_ref, o_ref):
    # x_ref : (TB, IN)   f32   -- streamed batch tile (natural layout)
    # w1_ref: (H1, IN)   bf16  -- resident (constant index_map)
    # b1_ref: (H1, 1)    f32
    # w2_ref: (H2, H1)   bf16
    # b2_ref: (H2, 1)    f32
    # w3_ref: (16, H2)   bf16  -- row 0 is the real fc3 weight, rows 1..15 zero
    # b3_ref: (1, 1)     f32 in SMEM
    # o_ref : (1, TB)    f32   -- lane-dense output row
    xb = x_ref[...].astype(jnp.bfloat16)                     # (TB, IN)
    # fc1: contract feature axes -> (H1, TB), batch stays on lanes.
    h1 = jax.lax.dot_general(
        w1_ref[...], xb, (((1,), (1,)), ((), ())),
        preferred_element_type=jnp.float32)
    h1 = jnp.maximum(h1 + b1_ref[...], 0.0)                  # (H1, TB) f32
    # dropout: identity at inference time
    h1b = h1.astype(jnp.bfloat16)
    # fc2
    h2 = jnp.dot(w2_ref[...], h1b, preferred_element_type=jnp.float32)
    h2 = jnp.maximum(h2 + b2_ref[...], 0.0)                  # (H2, TB) f32
    h2b = h2.astype(jnp.bfloat16)
    # fc3 (row-padded weight; rows 1..15 are zero)
    logits = jnp.dot(w3_ref[...], h2b, preferred_element_type=jnp.float32)
    logits = logits[0:1, :] + b3_ref[0, 0]                   # (1, TB)
    o_ref[...] = jax.nn.sigmoid(logits).astype(o_ref.dtype)


_TB_CANDIDATES = (512, 1024, 2048, 4096, 8192)


def _choose_tiling(B, tb_max=8192):
    """Pick (TB, B_pad): lane-dense 128-multiple tiles, minimal batch padding,
    and >=2 grid steps when possible so v7x can shard the parallel axis."""
    b128 = _round_up(max(B, 1), 128)
    if b128 <= 128:
        return 128, 128
    # cap TB at half the (128-rounded) batch -> at least 2 grid steps
    cap = min(tb_max, _round_up(-(-b128 // 2), 128))
    best = None
    for tb in _TB_CANDIDATES:
        if tb > cap:
            continue
        pad = _round_up(b128, tb) - b128
        key = (pad, -tb)
        if best is None or key < best[1]:
            best = (tb, key)
    tb = best[0] if best is not None else cap
    return tb, _round_up(b128, tb)


def hockeynet_forward(x, params, *, tb_max=8192):
    """x: (B, input_size) float.  params: packed kernel params from pack_params."""
    B, in_dim = x.shape
    w1, b1, w2, b2, w3, b3 = (params["w1"], params["b1"], params["w2"],
                              params["b2"], params["w3"], params["b3"])
    h1p, h2p = w1.shape[0], w2.shape[0]
    w3r = w3.shape[0]

    TB, B_pad = _choose_tiling(B, tb_max)

    xp = jnp.asarray(x, jnp.float32)
    if B_pad != B:
        xp = jnp.pad(xp, ((0, B_pad - B), (0, 0)))

    grid = (B_pad // TB,)

    flops = 2 * B_pad * (in_dim * h1p + h1p * h2p + h2p * w3r)
    bytes_accessed = int(
        xp.size * 4 + B_pad * 4
        + (w1.size + w2.size + w3.size) * 2
        + (b1.size + b2.size + 1) * 4)

    out = pl.pallas_call(
        hockeynet_kernel,
        out_shape=jax.ShapeDtypeStruct((1, B_pad), jnp.float32),
        grid=grid,
        in_specs=[
            pl.BlockSpec((TB, in_dim), lambda i: (i, 0)),        # x tile (streamed)
            pl.BlockSpec((h1p, in_dim), lambda i: (0, 0)),       # w1 (resident)
            pl.BlockSpec((h1p, 1), lambda i: (0, 0)),            # b1
            pl.BlockSpec((h2p, h1p), lambda i: (0, 0)),          # w2
            pl.BlockSpec((h2p, 1), lambda i: (0, 0)),            # b2
            pl.BlockSpec((w3r, h2p), lambda i: (0, 0)),          # w3 (row-padded)
            pl.BlockSpec(memory_space=pltpu.MemorySpace.SMEM),   # b3 scalar
        ],
        out_specs=pl.BlockSpec((1, TB), lambda i: (0, i)),
        compiler_params=pltpu.CompilerParams(
            dimension_semantics=("parallel",)),
        cost_estimate=pl.CostEstimate(
            flops=flops, transcendentals=B_pad, bytes_accessed=bytes_accessed),
    )(xp, w1, b1, w2, b2, w3, b3)

    return out[0, :B].reshape(B, 1)


def init_raw_params(key, input_size, hidden1, hidden2):
    """PyTorch-style nn.Linear params: W is (out, in), b is (out,)."""
    ks = jax.random.split(key, 6)

    def linear(kw, kb, fan_in, fan_out):
        bound = float(fan_in) ** -0.5
        w = jax.random.uniform(kw, (fan_out, fan_in), jnp.float32, -bound, bound)
        b = jax.random.uniform(kb, (fan_out,), jnp.float32, -bound, bound)
        return w, b

    w1, b1 = linear(ks[0], ks[1], input_size, hidden1)
    w2, b2 = linear(ks[2], ks[3], hidden1, hidden2)
    w3, b3 = linear(ks[4], ks[5], hidden2, 1)
    return {"w1": w1, "b1": b1, "w2": w2, "b2": b2, "w3": w3, "b3": b3}


def pack_params(raw, input_size, hidden1, hidden2):
    """bf16 weights, no 128-padding of hidden dims (they live on sublanes).
    Hidden dims are only rounded to the bf16 sublane pack (16); fc3's weight is
    row-padded to 16 so the tiny third matmul stays layout-friendly."""
    h1p = _round_up(hidden1, 16)
    h2p = _round_up(hidden2, 16)
    w1 = jnp.zeros((h1p, input_size), jnp.float32).at[:hidden1].set(
        raw["w1"]).astype(jnp.bfloat16)
    b1 = jnp.zeros((h1p, 1), jnp.float32).at[:hidden1, 0].set(raw["b1"])
    w2 = jnp.zeros((h2p, h1p), jnp.float32).at[:hidden2, :hidden1].set(
        raw["w2"]).astype(jnp.bfloat16)
    b2 = jnp.zeros((h2p, 1), jnp.float32).at[:hidden2, 0].set(raw["b2"])
    w3 = jnp.zeros((16, h2p), jnp.float32).at[0, :hidden2].set(
        raw["w3"][0]).astype(jnp.bfloat16)
    b3 = raw["b3"].reshape(1, 1).astype(jnp.float32)
    return {"w1": w1, "b1": b1, "w2": w2, "b2": b2, "w3": w3, "b3": b3}


def reference_forward(x, raw):
    """Pure-JAX reference mirroring the kernel numerics
    (bf16 operands, f32 MXU accumulation, f32 bias/ReLU)."""
    xb = x.astype(jnp.bfloat16)
    w1b = raw["w1"].astype(jnp.bfloat16)
    w2b = raw["w2"].astype(jnp.bfloat16)
    w3b = raw["w3"].astype(jnp.bfloat16)
    h1 = jnp.maximum(
        jnp.dot(xb, w1b.T, preferred_element_type=jnp.float32) + raw["b1"], 0.0)
    h2 = jnp.maximum(
        jnp.dot(h1.astype(jnp.bfloat16), w2b.T,
                preferred_element_type=jnp.float32) + raw["b2"], 0.0)
    z = jnp.dot(h2.astype(jnp.bfloat16), w3b.T,
                preferred_element_type=jnp.float32) + raw["b3"]
    return jax.nn.sigmoid(z)


if __name__ == "__main__":
    input_size, hidden1, hidden2, dropout_rate = 32, 64, 32, 0.2
    batch = 8

    key = jax.random.PRNGKey(0)
    kx, kp = jax.random.split(key)
    x = jax.random.normal(kx, (batch, input_size), jnp.float32)

    raw = init_raw_params(kp, input_size, hidden1, hidden2)
    params = pack_params(raw, input_size, hidden1, hidden2)

    out = hockeynet_forward(x, params)
    out = jax.block_until_ready(out)

    ref = reference_forward(x, raw)
    assert out.shape == (batch, 1)
    err = float(jnp.max(jnp.abs(out - ref)))
    assert jnp.allclose(out, ref, atol=1e-3, rtol=1e-3), \
        f"mismatch vs reference, max abs err {err}"

    print("KERNEL_OK")
</pallas_src>

<mosaic_0001>
module attributes {stable_mosaic.version = 11 : i64} {
  func.func @hockeynet_kernel(%arg0: i32, %arg1: memref<128x32xf32, #tpu.memory_space<vmem>>, %arg2: memref<64x32xbf16, #tpu.memory_space<vmem>>, %arg3: memref<64x1xf32, #tpu.memory_space<vmem>>, %arg4: memref<32x64xbf16, #tpu.memory_space<vmem>>, %arg5: memref<32x1xf32, #tpu.memory_space<vmem>>, %arg6: memref<16x32xbf16, #tpu.memory_space<vmem>>, %arg7: memref<1x1xf32, #tpu.memory_space<smem>>, %arg8: memref<1x128xf32, #tpu.memory_space<vmem>>) attributes {dimension_semantics = [#tpu.dimension_semantics<parallel>], iteration_bounds = array<i64: 1>, scalar_prefetch = 0 : i64, scratch_operands = 0 : i64, tpu.core_type = #tpu.core_type<tc>, window_params = [{transform_indices = @transform_0, window_bounds = array<i64: 128, 32>}, {pipeline_mode = #tpu.pipeline_mode<synchronous>, transform_indices = @transform_1, window_bounds = array<i64: 64, 32>}, {pipeline_mode = #tpu.pipeline_mode<synchronous>, transform_indices = @transform_2, window_bounds = array<i64: 64, 1>}, {pipeline_mode = #tpu.pipeline_mode<synchronous>, transform_indices = @transform_3, window_bounds = array<i64: 32, 64>}, {pipeline_mode = #tpu.pipeline_mode<synchronous>, transform_indices = @transform_4, window_bounds = array<i64: 32, 1>}, {pipeline_mode = #tpu.pipeline_mode<synchronous>, transform_indices = @transform_5, window_bounds = array<i64: 16, 32>}, {transform_indices = @transform_6, window_bounds = array<i64: 1, 1>}, {transform_indices = @transform_7, window_bounds = array<i64: 1, 128>}]} {
    %c0 = arith.constant 0 : index
    %c0_0 = arith.constant 0 : index
    %0 = vector.load %arg1[%c0, %c0_0] : memref<128x32xf32, #tpu.memory_space<vmem>>, vector<128x32xf32>
    %1 = arith.truncf %0 : vector<128x32xf32> to vector<128x32xbf16>
    %c0_1 = arith.constant 0 : index
    %c0_2 = arith.constant 0 : index
    %2 = vector.load %arg2[%c0_1, %c0_2] : memref<64x32xbf16, #tpu.memory_space<vmem>>, vector<64x32xbf16>
    %cst = arith.constant dense<0.000000e+00> : vector<64x128xf32>
    %3 = tpu.matmul %2, %1, %cst {dimension_numbers = #tpu.dot_dimension_numbers<[1], [1], [0], [0], [0, 0, 1, 0], [], []>} : vector<64x32xbf16>, vector<128x32xbf16>, vector<64x128xf32> -> vector<64x128xf32>
    %c0_3 = arith.constant 0 : index
    %c0_4 = arith.constant 0 : index
    %4 = vector.load %arg3[%c0_3, %c0_4] : memref<64x1xf32, #tpu.memory_space<vmem>>, vector<64x1xf32>
    %5 = vector.broadcast %4 : vector<64x1xf32> to vector<64x128xf32>
    %6 = arith.addf %3, %5 : vector<64x128xf32>
    %cst_5 = arith.constant 0.000000e+00 : f32
    %7 = vector.broadcast %cst_5 : f32 to vector<64x128xf32>
    %8 = arith.maximumf %6, %7 : vector<64x128xf32>
    %9 = arith.truncf %8 : vector<64x128xf32> to vector<64x128xbf16>
    %c0_6 = arith.constant 0 : index
    %c0_7 = arith.constant 0 : index
    %10 = vector.load %arg4[%c0_6, %c0_7] : memref<32x64xbf16, #tpu.memory_space<vmem>>, vector<32x64xbf16>
    %cst_8 = arith.constant dense<0.000000e+00> : vector<32x128xf32>
    %11 = tpu.matmul %10, %9, %cst_8 {dimension_numbers = #tpu.dot_dimension_numbers<[1], [0], [0], [1], [0, 0, 1, 1], [], []>} : vector<32x64xbf16>, vector<64x128xbf16>, vector<32x128xf32> -> vector<32x128xf32>
    %c0_9 = arith.constant 0 : index
    %c0_10 = arith.constant 0 : index
    %12 = vector.load %arg5[%c0_9, %c0_10] : memref<32x1xf32, #tpu.memory_space<vmem>>, vector<32x1xf32>
    %13 = vector.broadcast %12 : vector<32x1xf32> to vector<32x128xf32>
    %14 = arith.addf %11, %13 : vector<32x128xf32>
    %cst_11 = arith.constant 0.000000e+00 : f32
    %15 = vector.broadcast %cst_11 : f32 to vector<32x128xf32>
    %16 = arith.maximumf %14, %15 : vector<32x128xf32>
    %17 = arith.truncf %16 : vector<32x128xf32> to vector<32x128xbf16>
    %c0_12 = arith.constant 0 : index
    %c0_13 = arith.constant 0 : index
    %18 = vector.load %arg6[%c0_12, %c0_13] : memref<16x32xbf16, #tpu.memory_space<vmem>>, vector<16x32xbf16>
    %cst_14 = arith.constant dense<0.000000e+00> : vector<16x128xf32>
    %19 = tpu.matmul %18, %17, %cst_14 {dimension_numbers = #tpu.dot_dimension_numbers<[1], [0], [0], [1], [0, 0, 1, 1], [], []>} : vector<16x32xbf16>, vector<32x128xbf16>, vector<16x128xf32> -> vector<16x128xf32>
    %20 = vector.extract_strided_slice %19 {offsets = [0, 0], sizes = [1, 128], strides = [1, 1]} : vector<16x128xf32> to vector<1x128xf32>
    %c0_15 = arith.constant 0 : index
    %c0_16 = arith.constant 0 : index
    %21 = memref.load %arg7[%c0_15, %c0_16] : memref<1x1xf32, #tpu.memory_space<smem>>
    %22 = vector.broadcast %21 : f32 to vector<1x128xf32>
    %23 = arith.addf %20, %22 : vector<1x128xf32>
    %24 = arith.negf %23 : vector<1x128xf32>
    %25 = math.exp %24 : vector<1x128xf32>
    %cst_17 = arith.constant 1.000000e+00 : f32
    %26 = vector.broadcast %cst_17 : f32 to vector<1x128xf32>
    %27 = arith.addf %26, %25 : vector<1x128xf32>
    %28 = arith.divf %26, %27 : vector<1x128xf32>
    %c0_18 = arith.constant 0 : index
    %c0_19 = arith.constant 0 : index
    %29 = vector.load %arg8[%c0_18, %c0_19] : memref<1x128xf32, #tpu.memory_space<vmem>>, vector<1x128xf32>
    tpu.vector_store %arg8[%c0_18, %c0_19], %28 {strides = array<i32>} : memref<1x128xf32, #tpu.memory_space<vmem>>, vector<1x128xf32>,
    return
  }
  func.func @transform_0(%arg0: i32) -> (i32, i32) {
    %c0_i32 = arith.constant 0 : i32
    %c0_i32_0 = arith.constant 0 : i32
    return %arg0, %c0_i32 : i32, i32
  }
  func.func @transform_1(%arg0: i32) -> (i32, i32) {
    %c0_i32 = arith.constant 0 : i32
    %c0_i32_0 = arith.constant 0 : i32
    %c0_i32_1 = arith.constant 0 : i32
    return %c0_i32, %c0_i32_0 : i32, i32
  }
  func.func @transform_2(%arg0: i32) -> (i32, i32) {
    %c0_i32 = arith.constant 0 : i32
    %c0_i32_0 = arith.constant 0 : i32
    %c0_i32_1 = arith.constant 0 : i32
    return %c0_i32, %c0_i32_0 : i32, i32
  }
  func.func @transform_3(%arg0: i32) -> (i32, i32) {
    %c0_i32 = arith.constant 0 : i32
    %c0_i32_0 = arith.constant 0 : i32
    %c0_i32_1 = arith.constant 0 : i32
    return %c0_i32, %c0_i32_0 : i32, i32
  }
  func.func @transform_4(%arg0: i32) -> (i32, i32) {
    %c0_i32 = arith.constant 0 : i32
    %c0_i32_0 = arith.constant 0 : i32
    %c0_i32_1 = arith.constant 0 : i32
    return %c0_i32, %c0_i32_0 : i32, i32
  }
  func.func @transform_5(%arg0: i32) -> (i32, i32) {
    %c0_i32 = arith.constant 0 : i32
    %c0_i32_0 = arith.constant 0 : i32
    %c0_i32_1 = arith.constant 0 : i32
    return %c0_i32, %c0_i32_0 : i32, i32
  }
  func.func @transform_6(%arg0: i32) -> (i32, i32) {
    %c0_i32 = arith.constant 0 : i32
    %c0_i32_0 = arith.constant 0 : i32
    %c0_i32_1 = arith.constant 0 : i32
    return %c0_i32, %c0_i32_0 : i32, i32
  }
  func.func @transform_7(%arg0: i32) -> (i32, i32) {
    %c0_i32 = arith.constant 0 : i32
    %c0_i32_0 = arith.constant 0 : i32
    return %c0_i32, %arg0 : i32, i32
  }
}

</mosaic_0001>

<llo_original>
// kernel: tpu_custom_call.1
$region0: #{tpu_custom_call.1}
  #allocation0 [shape = 'u32[]', space=smem, size = 0x4, offset = 0x4, fixed_abs, tag = 'smem constant byte address 0x4 - core index']
  #allocation1 [shape = 'u32[144,128]{1,0:T(1,128)}', space=vmem, size = 0x12000, scoped, tag = 'internal scratch']
  #allocation2 [shape = 'f32[1,1]{1,0:T(1,128)S(6)}', space=smem, size = 0x200, scoped, tag = 'scoped memory for tpu_custom_call.1']
  %s0 = inlined_call_operand.vmem [shape: f32[128,32], index: 0, kind: input, shape index: {}]
  %s1 = inlined_call_operand.vmem [shape: bf16[64,32], index: 1, kind: input, shape index: {}]
  %s2 = inlined_call_operand.vmem [shape: f32[64,1], index: 2, kind: input, shape index: {}]
  %s3 = inlined_call_operand.vmem [shape: bf16[32,64], index: 3, kind: input, shape index: {}]
  %s4 = inlined_call_operand.vmem [shape: f32[32,1], index: 4, kind: input, shape index: {}]
  %s5 = inlined_call_operand.vmem [shape: bf16[16,32], index: 5, kind: input, shape index: {}]
  %s6 = inlined_call_operand.<no memory space> [shape: f32[1,1], index: 6, kind: input, shape index: {}]
  %s7 = inlined_call_operand.hbm [shape: f32[1,128], index: 7, kind: output, shape index: {}]
  %s8 = sld [smem:[#allocation0]]
  $region38: #{tpu_custom_call.1} parent=0
    _
  %s10 = ssub.s32 1, %s8
  %s11 = scalar_select 0, %s10, %s8
  %12 = sst [smem:[#allocation2]] %s6
  $region1: #{tpu_custom_call.1} parent=0
    #allocation3 [shape = 'u8[512]{0}', space=vmem, size = 0x400, scoped, tag = 'output window, operand 0, single buffered']
    #allocation4 [shape = 's32[1]{0}', space=sflag, size = 0x4, scoped, tag = 'scoped memory for tpu_custom_call.1']
    %13 = vsyncpa [#allocation4], 0
    // Predicated region
    $region2: #{tpu_custom_call.1} parent=1 // pred_check
      _
    $region3: #{tpu_custom_call.1} parent=1 // pred_check_branch
      %15 = sbr.rel (0) target = $region5
    $region4: #{tpu_custom_call.1} parent=1 // pred_region
      _
    $region5: #{tpu_custom_call.1} parent=1 // pred_fallthru
      _
    // Predicated region
    $region6: #{tpu_custom_call.1} parent=1 // pred_check
      _
    $region7: #{tpu_custom_call.1} parent=1 // pred_check_branch
      %17 = sbr.rel (0) target = $region9
    $region8: #{tpu_custom_call.1} parent=1 // pred_region
      _
    $region9: #{tpu_custom_call.1} parent=1 // pred_fallthru
      _
    // Predicated region
    $region10: #{tpu_custom_call.1} parent=1 // pred_check
      _
    $region11: #{tpu_custom_call.1} parent=1 // pred_check_branch
      %19 = sbr.rel (0) target = $region13
    $region12: #{tpu_custom_call.1} parent=1 // pred_region
      _
    $region13: #{tpu_custom_call.1} parent=1 // pred_fallthru
      _
    // Predicated region
    $region14: #{tpu_custom_call.1} parent=1 // pred_check
      _
    $region15: #{tpu_custom_call.1} parent=1 // pred_check_branch
      %21 = sbr.rel (0) target = $region17
    $region16: #{tpu_custom_call.1} parent=1 // pred_region
      _
    $region17: #{tpu_custom_call.1} parent=1 // pred_fallthru
      _
    // Predicated region
    $region18: #{tpu_custom_call.1} parent=1 // pred_check
      _
    $region19: #{tpu_custom_call.1} parent=1 // pred_check_branch
      %23 = sbr.rel (0) target = $region21
    $region20: #{tpu_custom_call.1} parent=1 // pred_region
      _
    $region21: #{tpu_custom_call.1} parent=1 // pred_fallthru
      _
    // Predicated region
    $region22: #{tpu_custom_call.1} parent=1 // pred_check
      _
    $region23: #{tpu_custom_call.1} parent=1 // pred_check_branch
      %25 = sbr.rel (0) target = $region25
    $region24: #{tpu_custom_call.1} parent=1 // pred_region
      _
    $region25: #{tpu_custom_call.1} parent=1 // pred_fallthru
      _
    // Predicated region
    $region26: #{tpu_custom_call.1} parent=1 // pred_check
      _
    $region27: #{tpu_custom_call.1} parent=1 // pred_check_branch
      %27 = sbr.rel (0) target = $region29
    $region28: #{tpu_custom_call.1} parent=1 // pred_region
      _
    $region29: #{tpu_custom_call.1} parent=1 // pred_fallthru
      _
    %v29 = vld [vmem:[%s0] sm:$0xff]
    %v30 = vld [vmem:[%s0 + $0x8] sm:$0xff]
    %v31 = vld [vmem:[%s0 + $0x10] sm:$0xff]
    %v32 = vld [vmem:[%s0 + $0x18] sm:$0xff]
    %v33 = vld [vmem:[%s0 + $0x20] sm:$0xff]
    %v34 = vld [vmem:[%s0 + $0x28] sm:$0xff]
    %v35 = vld [vmem:[%s0 + $0x30] sm:$0xff]
    %v36 = vld [vmem:[%s0 + $0x38] sm:$0xff]
    %v37 = vld [vmem:[%s0 + $0x40] sm:$0xff]
    %v38 = vld [vmem:[%s0 + $0x48] sm:$0xff]
    %v39 = vld [vmem:[%s0 + $0x50] sm:$0xff]
    %v40 = vld [vmem:[%s0 + $0x58] sm:$0xff]
    %v41 = vld [vmem:[%s0 + $0x60] sm:$0xff]
    %v42 = vld [vmem:[%s0 + $0x68] sm:$0xff]
    %v43 = vld [vmem:[%s0 + $0x70] sm:$0xff]
    %v44 = vld [vmem:[%s0 + $0x78] sm:$0xff]
    %v45 = vpack.c.bf16 %v30, %v29
    %v46 = vpack.c.bf16 %v32, %v31
    %v47 = vpack.c.bf16 %v34, %v33
    %v48 = vpack.c.bf16 %v36, %v35
    %v49 = vpack.c.bf16 %v38, %v37
    %v50 = vpack.c.bf16 %v40, %v39
    %v51 = vpack.c.bf16 %v42, %v41
    %v52 = vpack.c.bf16 %v44, %v43
    %v53 = vld [vmem:[%s1] sm:$0xf]
    %v54 = vld [vmem:[%s1 + $0x4] sm:$0xf]
    %v55 = vld [vmem:[%s1 + $0x8] sm:$0xf]
    %v56 = vld [vmem:[%s1 + $0xc] sm:$0xf]
    %v57 = vld [vmem:[%s1 + $0x10] sm:$0xf]
    %v58 = vld [vmem:[%s1 + $0x14] sm:$0xf]
    %v59 = vld [vmem:[%s1 + $0x18] sm:$0xf]
    %v60 = vld [vmem:[%s1 + $0x1c] sm:$0xf]
    %v61 = vld [vmem:[%s2] sm:$0xff]
    %v62 = vld [vmem:[%s2 + $0x8] sm:$0xff]
    %v63 = vld [vmem:[%s2 + $0x10] sm:$0xff]
    %v64 = vld [vmem:[%s2 + $0x18] sm:$0xff]
    %v65 = vld [vmem:[%s2 + $0x20] sm:$0xff]
    %v66 = vld [vmem:[%s2 + $0x28] sm:$0xff]
    %v67 = vld [vmem:[%s2 + $0x30] sm:$0xff]
    %v68 = vld [vmem:[%s2 + $0x38] sm:$0xff]
    %70 = vset.pattern.permute.xlu0 0
    %71 = vperm.xlu0 %70, %v61
    %v72 = vpop.permute.xlu0 %71
    %75 = vset.pattern.permute.xlu0 0
    %76 = vperm.xlu0 %75, %v62
    %v77 = vpop.permute.xlu0 %76
    %80 = vset.pattern.permute.xlu0 0
    %81 = vperm.xlu0 %80, %v63
    %v82 = vpop.permute.xlu0 %81
    %85 = vset.pattern.permute.xlu0 0
    %86 = vperm.xlu0 %85, %v64
    %v87 = vpop.permute.xlu0 %86
    %90 = vset.pattern.permute.xlu0 0
    %91 = vperm.xlu0 %90, %v65
    %v92 = vpop.permute.xlu0 %91
    %95 = vset.pattern.permute.xlu0 0
    %96 = vperm.xlu0 %95, %v66
    %v97 = vpop.permute.xlu0 %96
    %100 = vset.pattern.permute.xlu0 0
    %101 = vperm.xlu0 %100, %v67
    %v102 = vpop.permute.xlu0 %101
    %105 = vset.pattern.permute.xlu0 0
    %106 = vperm.xlu0 %105, %v68
    %v107 = vpop.permute.xlu0 %106
    %v117 = vunpack.c.l.b16 %v53
    %v118 = vunpack.c.l.b16 %v54
    %v119 = vunpack.c.l.b16 %v55
    %v120 = vunpack.c.l.b16 %v56
    %v121 = vunpack.c.l.b16 %v57
    %v122 = vunpack.c.l.b16 %v58
    %v123 = vunpack.c.l.b16 %v59
    %v124 = vunpack.c.l.b16 %v60
    %v125 = vpack.c.b16 %v118, %v117
    %v126 = vpack.c.b16 %v120, %v119
    %v127 = vpack.c.b16 %v122, %v121
    %v128 = vpack.c.b16 %v124, %v123
    %vm129 = vcmask 261120
    %v131 = vsel %vm129, %v125, 0
    %v134 = vsel %vm129, %v126, 0
    %v137 = vsel %vm129, %v127, 0
    %v140 = vsel %vm129, %v128, 0
    %v143 = vsel %vm129, %v45, 0
    %v146 = vsel %vm129, %v46, 0
    %v149 = vsel %vm129, %v47, 0
    %v152 = vsel %vm129, %v48, 0
    %v155 = vsel %vm129, %v49, 0
    %v158 = vsel %vm129, %v50, 0
    %v161 = vsel %vm129, %v51, 0
    %v164 = vsel %vm129, %v52, 0
    %166 = vmatprep.subr.bf16.mxu0 0
    %167 = vmatpush1.bf16.xpose.msra.mxu0 %v143
    %168 = vmatprep.subr.bf16.mxu0 0
    %169 = vmatpush1.bf16.xpose.msra.mxu0 %v146
    %170 = vmatprep.subr.bf16.mxu0 0
    %171 = vmatpush1.bf16.xpose.msra.mxu0 %v149
    %172 = vmatprep.subr.bf16.mxu0 0
    %173 = vmatpush1.bf16.xpose.msra.mxu0 %v152
    %174 = vmatprep.subr.bf16.mxu0 0
    %175 = vmatpush1.bf16.xpose.msra.mxu0 %v155
    %176 = vmatprep.subr.bf16.mxu0 0
    %177 = vmatpush1.bf16.xpose.msra.mxu0 %v158
    %178 = vmatprep.subr.bf16.mxu0 0
    %179 = vmatpush1.bf16.xpose.msra.mxu0 %v161
    %180 = vmatprep.subr.bf16.mxu0 0
    %181 = vmatpush1.bf16.xpose.msra.mxu0 %v164
    %182 = vmatprep.subr.bf16.mxu0 0
    %183 = vmatpush1.bf16.xpose.msra.mxu0 0
    %184 = vmatprep.subr.bf16.mxu0 0
    %185 = vmatpush1.bf16.xpose.msra.mxu0 0
    %186 = vmatprep.subr.bf16.mxu0 0
    %187 = vmatpush1.bf16.xpose.msra.mxu0 0
    %188 = vmatprep.subr.bf16.mxu0 0
    %189 = vmatpush1.bf16.xpose.msra.mxu0 0
    %190 = vmatprep.subr.bf16.mxu0 0
    %191 = vmatpush1.bf16.xpose.msra.mxu0 0
    %192 = vmatprep.subr.bf16.mxu0 0
    %193 = vmatpush1.bf16.xpose.msra.mxu0 0
    %194 = vmatprep.subr.bf16.mxu0 0
    %195 = vmatpush1.bf16.xpose.msra.mxu0 0
    %196 = vmatprep.subr.bf16.mxu0 0
    %197 = vmatpush1.bf16.xpose.msra.mxu0 0
    %198 = vmatprep.mubr.bf16.mxu0 0
    %199 = vmatmul.mubr.bf16.gmra.mrb[0].mxu0 %v131
    %v200 = vpop.f32.mrb[0].mxu0
    %v201 = vadd.f32 %v72, %v200
    %v202 = vpop.f32.mrb[0].mxu0
    %v203 = vpop.f32.mrb[0].mxu0
    %v204 = vadd.f32 %v77, %v203
    %v205 = vpop.f32.mrb[0].mxu0
    %206 = vmatprep.mubr.bf16.mxu0 0
    %207 = vmatmul.mubr.bf16.gmra.mrb[0].mxu0 %v134
    %v208 = vpop.f32.mrb[0].mxu0
    %v209 = vadd.f32 %v82, %v208
    %v210 = vpop.f32.mrb[0].mxu0
    %v211 = vpop.f32.mrb[0].mxu0
    %v212 = vadd.f32 %v87, %v211
    %v213 = vpop.f32.mrb[0].mxu0
    %214 = vmatprep.mubr.bf16.mxu0 0
    %215 = vmatmul.mubr.bf16.gmra.mrb[0].mxu0 %v137
    %v216 = vpop.f32.mrb[0].mxu0
    %v217 = vadd.f32 %v92, %v216
    %v218 = vpop.f32.mrb[0].mxu0
    %v219 = vpop.f32.mrb[0].mxu0
    %v220 = vadd.f32 %v97, %v219
    %v221 = vpop.f32.mrb[0].mxu0
    %222 = vmatprep.mubr.bf16.mxu0 0
    %223 = vmatmul.mubr.bf16.gmra.mrb[0].mxu0 %v140
    %v224 = vpop.f32.mrb[0].mxu0
    %v225 = vadd.f32 %v102, %v224
    %v226 = vpop.f32.mrb[0].mxu0
    %v227 = vpop.f32.mrb[0].mxu0
    %v228 = vadd.f32 %v107, %v227
    %v229 = vpop.f32.mrb[0].mxu0
    %230 = vdwg.mxu0
    %v231 = vmax.f32 %v201, 0.0
    %v232 = vmax.f32 %v204, 0.0
    %v233 = vmax.f32 %v209, 0.0
    %v234 = vmax.f32 %v212, 0.0
    %v235 = vmax.f32 %v217, 0.0
    %v236 = vmax.f32 %v220, 0.0
    %v237 = vmax.f32 %v225, 0.0
    %v238 = vmax.f32 %v228, 0.0
    %v239 = vpack.c.bf16 %v232, %v231
    %v240 = vpack.c.bf16 %v234, %v233
    %v241 = vpack.c.bf16 %v236, %v235
    %v242 = vpack.c.bf16 %v238, %v237
    %v243 = vld [vmem:[%s3] sm:$0xf]
    %v244 = vld [vmem:[%s3 + $0x4] sm:$0xf]
    %v245 = vld [vmem:[%s3 + $0x8] sm:$0xf]
    %v246 = vld [vmem:[%s3 + $0xc] sm:$0xf]
    %v247 = vld [vmem:[%s4] sm:$0xff]
    %v248 = vld [vmem:[%s4 + $0x8] sm:$0xff]
    %v249 = vld [vmem:[%s4 + $0x10] sm:$0xff]
    %v250 = vld [vmem:[%s4 + $0x18] sm:$0xff]
    %252 = vset.pattern.permute.xlu0 0
    %253 = vperm.xlu0 %252, %v247
    %v254 = vpop.permute.xlu0 %253
    %257 = vset.pattern.permute.xlu0 0
    %258 = vperm.xlu0 %257, %v248
    %v259 = vpop.permute.xlu0 %258
    %262 = vset.pattern.permute.xlu0 0
    %263 = vperm.xlu0 %262, %v249
    %v264 = vpop.permute.xlu0 %263
    %267 = vset.pattern.permute.xlu0 0
    %268 = vperm.xlu0 %267, %v250
    %v269 = vpop.permute.xlu0 %268
    %v275 = vunpack.c.l.b16 %v243
    %v276 = vunpack.c.l.b16 %v244
    %v277 = vunpack.c.l.b16 %v245
    %v278 = vunpack.c.l.b16 %v246
    %v279 = vpack.c.b16 %v276, %v275
    %v280 = vpack.c.b16 %v278, %v277
    %vm281 = vcmask 523264
    %v283 = vsel %vm281, %v279, 0
    %v286 = vsel %vm281, %v280, 0
    %288 = vmatprep.subr.bf16.mxu0 0
    %289 = vmatpush1.bf16.msra.mxu0 %v239
    %290 = vmatprep.subr.bf16.mxu0 0
    %291 = vmatpush1.bf16.msra.mxu0 %v240
    %292 = vmatprep.subr.bf16.mxu0 0
    %293 = vmatpush1.bf16.msra.mxu0 %v241
    %294 = vmatprep.subr.bf16.mxu0 0
    %295 = vmatpush1.bf16.msra.mxu0 %v242
    %296 = vmatprep.subr.bf16.mxu0 0
    %297 = vmatpush1.bf16.msra.mxu0 0
    %298 = vmatprep.subr.bf16.mxu0 0
    %299 = vmatpush1.bf16.msra.mxu0 0
    %300 = vmatprep.subr.bf16.mxu0 0
    %301 = vmatpush1.bf16.msra.mxu0 0
    %302 = vmatprep.subr.bf16.mxu0 0
    %303 = vmatpush1.bf16.msra.mxu0 0
    %304 = vmatprep.subr.bf16.mxu0 0
    %305 = vmatpush1.bf16.msra.mxu0 0
    %306 = vmatprep.subr.bf16.mxu0 0
    %307 = vmatpush1.bf16.msra.mxu0 0
    %308 = vmatprep.subr.bf16.mxu0 0
    %309 = vmatpush1.bf16.msra.mxu0 0
    %310 = vmatprep.subr.bf16.mxu0 0
    %311 = vmatpush1.bf16.msra.mxu0 0
    %312 = vmatprep.subr.bf16.mxu0 0
    %313 = vmatpush1.bf16.msra.mxu0 0
    %314 = vmatprep.subr.bf16.mxu0 0
    %315 = vmatpush1.bf16.msra.mxu0 0
    %316 = vmatprep.subr.bf16.mxu0 0
    %317 = vmatpush1.bf16.msra.mxu0 0
    %318 = vmatprep.subr.bf16.mxu0 0
    %319 = vmatpush1.bf16.msra.mxu0 0
    %320 = vmatprep.mubr.bf16.mxu0 0
    %321 = vmatmul.mubr.bf16.gmra.mrb[0].mxu0 %v283
    %v322 = vpop.f32.mrb[0].mxu0
    %v323 = vadd.f32 %v254, %v322
    %v324 = vpop.f32.mrb[0].mxu0
    %v325 = vpop.f32.mrb[0].mxu0
    %v326 = vadd.f32 %v259, %v325
    %v327 = vpop.f32.mrb[0].mxu0
    %328 = vmatprep.mubr.bf16.mxu0 0
    %329 = vmatmul.mubr.bf16.gmra.mrb[0].mxu0 %v286
    %v330 = vpop.f32.mrb[0].mxu0
    %v331 = vadd.f32 %v264, %v330
    %v332 = vpop.f32.mrb[0].mxu0
    %v333 = vpop.f32.mrb[0].mxu0
    %v334 = vadd.f32 %v269, %v333
    %v335 = vpop.f32.mrb[0].mxu0
    %336 = vdwg.mxu0
    %v337 = vmax.f32 %v323, 0.0
    %v338 = vmax.f32 %v326, 0.0
    %v339 = vmax.f32 %v331, 0.0
    %v340 = vmax.f32 %v334, 0.0
    %v341 = vpack.c.bf16 %v338, %v337
    %v342 = vpack.c.bf16 %v340, %v339
    %v343 = vld [vmem:[%s5] sm:$0xf]
    %v344 = vld [vmem:[%s5 + $0x4] sm:$0xf]
    %v347 = vunpack.c.l.b16 %v343
    %v348 = vunpack.c.l.b16 %v344
    %v349 = vpack.c.b16 %v348, %v347
    %v351 = vsel %vm129, %v349, 0
    %353 = vmatprep.subr.bf16.mxu0 0
    %354 = vmatpush1.bf16.msra.mxu0 %v341
    %355 = vmatprep.subr.bf16.mxu0 0
    %356 = vmatpush1.bf16.msra.mxu0 %v342
    %357 = vmatprep.subr.bf16.mxu0 0
    %358 = vmatpush1.bf16.msra.mxu0 0
    %359 = vmatprep.subr.bf16.mxu0 0
    %360 = vmatpush1.bf16.msra.mxu0 0
    %361 = vmatprep.subr.bf16.mxu0 0
    %362 = vmatpush1.bf16.msra.mxu0 0
    %363 = vmatprep.subr.bf16.mxu0 0
    %364 = vmatpush1.bf16.msra.mxu0 0
    %365 = vmatprep.subr.bf16.mxu0 0
    %366 = vmatpush1.bf16.msra.mxu0 0
    %367 = vmatprep.subr.bf16.mxu0 0
    %368 = vmatpush1.bf16.msra.mxu0 0
    %369 = vmatprep.subr.bf16.mxu0 0
    %370 = vmatpush1.bf16.msra.mxu0 0
    %371 = vmatprep.subr.bf16.mxu0 0
    %372 = vmatpush1.bf16.msra.mxu0 0
    %373 = vmatprep.subr.bf16.mxu0 0
    %374 = vmatpush1.bf16.msra.mxu0 0
    %375 = vmatprep.subr.bf16.mxu0 0
    %376 = vmatpush1.bf16.msra.mxu0 0
    %377 = vmatprep.subr.bf16.mxu0 0
    %378 = vmatpush1.bf16.msra.mxu0 0
    %379 = vmatprep.subr.bf16.mxu0 0
    %380 = vmatpush1.bf16.msra.mxu0 0
    %381 = vmatprep.subr.bf16.mxu0 0
    %382 = vmatpush1.bf16.msra.mxu0 0
    %383 = vmatprep.subr.bf16.mxu0 0
    %384 = vmatpush1.bf16.msra.mxu0 0
    %385 = vmatprep.mubr.bf16.mxu0 0
    %386 = vmatmul.mubr.bf16.gmra.mrb[0].mxu0 %v351
    %v387 = vpop.f32.mrb[0].mxu0
    %v388 = vadd.f32 0.0, %v387
    %v389 = vpop.f32.mrb[0].mxu0
    %v390 = vpop.f32.mrb[0].mxu0
    %v391 = vpop.f32.mrb[0].mxu0
    %392 = vdwg.mxu0
    %s393 = sld [smem:[#allocation2]]
    %v394 = vstv %s393
    %v395 = vadd.f32 %v388, %v394
    %v396 = vxor.u32 %v395, 2147483648
    %v397 = vmul.f32 %v396, 1.442695
    %v398 = vpow.pop %v397
    %v399 = vadd.f32 %v398, 1.0
    %v400 = vrcp.pop %v399
    %v401 = vmul.f32 1.0, %v400
    %402 = vst [vmem:[#allocation3] sm:$0x1] %v401
    // Predicated region
    $region30: #{tpu_custom_call.1} parent=1 // pred_check
      _
    $region31: #{tpu_custom_call.1} parent=1 // pred_check_branch
      %404 = sbr.rel (0) target = $region33
    $region32: #{tpu_custom_call.1} parent=1 // pred_region
      %s406 = ssub.s32 16, 16
      %407 = vsyncadd [#allocation4], %s406
      %s409 = sshll.u32 [#allocation3], 4
      %s410 = int_to_ptr.vmem [resolvable:$true] %s409
      %412 = dma.vmem_to_hbm [thread:$0]  %s410, 16, %s7, [#allocation4]
    $region33: #{tpu_custom_call.1} parent=1 // pred_fallthru
      _
    // Predicated region
    $region34: #{tpu_custom_call.1} parent=1 // pred_check
      _
    $region35: #{tpu_custom_call.1} parent=1 // pred_check_branch
      %414 = sbr.rel (0) target = $region37
    $region36: #{tpu_custom_call.1} parent=1 // pred_region
      %415 = dma.done [#allocation4], 16
    $region37: #{tpu_custom_call.1} parent=1 // pred_fallthru
      _
    %416 = vsyncpa [#allocation4], 1

</llo_original>
